<compile_context>
chip_gen: v5e
topology: v5e:2x2
jax: 0.10.0
libtpu: 0.0.40
codegen_flags: <defaults>
</compile_context>

<pallas_src>
import functools

import jax
import jax.numpy as jnp
from jax.experimental import pallas as pl
from jax.experimental.pallas import tpu as pltpu

LEAKY_SLOPE = 0.01
BN_EPS = 1e-5


def _round_up(x, m):
    return (x + m - 1) // m * m


def _bn_leaky(y, gamma, beta, n_true):
    """Training-mode BatchNorm1d (batch mean, biased variance) + leaky_relu.

    `y` may contain zero-padded rows beyond `n_true`; since those rows are
    exactly zero they contribute nothing to the sums, so dividing by the true
    batch size keeps the statistics exact.
    """
    inv_n = 1.0 / n_true
    s1 = jnp.sum(y, axis=0, keepdims=True)
    s2 = jnp.sum(y * y, axis=0, keepdims=True)
    mean = s1 * inv_n
    var = jnp.maximum(s2 * inv_n - mean * mean, 0.0)
    scale = gamma * jax.lax.rsqrt(var + BN_EPS)       # fused per-column scale
    out = (y - mean) * scale + beta
    return jnp.maximum(out, LEAKY_SLOPE * out)        # leaky_relu without select


def box_head_kernel(x_ref, w1_ref, g1_ref, be1_ref, w2_ref, g2_ref, be2_ref,
                    o_ref, acc_ref, *, n_true):
    kk = pl.program_id(0)

    @pl.when(kk == 0)
    def _init():
        acc_ref[...] = jnp.zeros_like(acc_ref)

    # fc1 partial product for this K tile (bf16 operands, f32 MXU accumulation).
    acc_ref[...] += jnp.dot(x_ref[...], w1_ref[...],
                            preferred_element_type=jnp.float32)

    @pl.when(kk == pl.num_programs(0) - 1)
    def _epilogue():
        n_pad = acc_ref.shape[0]
        h = _bn_leaky(acc_ref[...], g1_ref[...], be1_ref[...], n_true)
        if n_pad != n_true:
            # Zero out padded rows so fc2's batch statistics stay exact.
            rows = jax.lax.broadcasted_iota(jnp.int32, (n_pad, 1), 0)
            h = jnp.where(rows < n_true, h, 0.0)
        y2 = jnp.dot(h.astype(jnp.bfloat16), w2_ref[...],
                     preferred_element_type=jnp.float32)
        o_ref[...] = _bn_leaky(y2, g2_ref[...], be2_ref[...], n_true)


def box_head_forward(x_nchw, params, *, tk_max=512):
    """x_nchw: (N, C, H, W) float32. Returns (N, representation_size) float32."""
    n = x_nchw.shape[0]
    x = x_nchw.reshape(n, -1)                         # flatten(start_dim=1)
    k = x.shape[1]

    w1, b1, g1, be1, w2, b2, g2, be2 = params
    rep = w1.shape[1]
    # Linear bias is removed exactly by BatchNorm's mean subtraction -> drop it.
    del b1, b2

    n_pad = _round_up(n, 8)
    rep_pad = _round_up(rep, 128)
    tk = min(tk_max, _round_up(k, 128))               # conservative K-tile (fits v5e/v7x)
    k_pad = _round_up(k, tk)
    ksteps = k_pad // tk

    def pad2(a, rows, cols, dtype, fill=0.0):
        out = jnp.full((rows, cols), fill, dtype)
        return out.at[:a.shape[0], :a.shape[1]].set(a.astype(dtype))

    # bf16 operands for the MXU (accumulation stays f32 in the kernel).
    xp = pad2(x, n_pad, k_pad, jnp.bfloat16)
    w1p = pad2(w1, k_pad, rep_pad, jnp.bfloat16)
    w2p = pad2(w2, rep_pad, rep_pad, jnp.bfloat16)
    g1p = pad2(g1.reshape(1, rep), 1, rep_pad, jnp.float32, fill=1.0)
    be1p = pad2(be1.reshape(1, rep), 1, rep_pad, jnp.float32)
    g2p = pad2(g2.reshape(1, rep), 1, rep_pad, jnp.float32, fill=1.0)
    be2p = pad2(be2.reshape(1, rep), 1, rep_pad, jnp.float32)

    grid_spec = pltpu.PrefetchScalarGridSpec(
        num_scalar_prefetch=0,
        grid=(ksteps,),
        in_specs=[
            pl.BlockSpec((n_pad, tk), lambda kk: (0, kk)),        # x K-tiles
            pl.BlockSpec((tk, rep_pad), lambda kk: (kk, 0)),      # w1 K-tiles
            pl.BlockSpec((1, rep_pad), lambda kk: (0, 0)),        # gamma1
            pl.BlockSpec((1, rep_pad), lambda kk: (0, 0)),        # beta1
            pl.BlockSpec((rep_pad, rep_pad), lambda kk: (0, 0)),  # w2 (resident)
            pl.BlockSpec((1, rep_pad), lambda kk: (0, 0)),        # gamma2
            pl.BlockSpec((1, rep_pad), lambda kk: (0, 0)),        # beta2
        ],
        out_specs=pl.BlockSpec((n_pad, rep_pad), lambda kk: (0, 0)),
        scratch_shapes=[pltpu.VMEM((n_pad, rep_pad), jnp.float32)],
    )

    # VMEM budget: double-buffered bf16 x/w1 tiles + resident w2/affine params
    # + f32 accumulator + f32 output block; 2x headroom, capped below v7x's 64 MiB.
    vmem_need = (2 * 2 * (n_pad * tk + tk * rep_pad)
                 + 2 * rep_pad * rep_pad
                 + 4 * 4 * rep_pad
                 + 2 * 4 * n_pad * rep_pad)
    vmem_limit = int(min(48 * 1024 * 1024, max(16 * 1024 * 1024, 2 * vmem_need)))

    cost = pl.CostEstimate(
        flops=2 * n * k * rep + 2 * n * rep * rep,
        transcendentals=0,
        bytes_accessed=(xp.size + w1p.size + w2p.size) * 2
                       + 4 * rep_pad * 4 + n_pad * rep_pad * 4,
    )

    out = pl.pallas_call(
        functools.partial(box_head_kernel, n_true=n),
        out_shape=jax.ShapeDtypeStruct((n_pad, rep_pad), jnp.float32),
        grid_spec=grid_spec,
        compiler_params=pltpu.CompilerParams(
            dimension_semantics=("arbitrary",),
            vmem_limit_bytes=vmem_limit,
        ),
        cost_estimate=cost,
    )(xp, w1p, g1p, be1p, w2p, g2p, be2p)

    # TODO(synk): on v7x, shard the rep axis across the two TensorCores (BN stats
    # are per-column so no cross-core reduction is needed) with fc2 as a second call.
    return out[:n, :rep]


def _reference_forward(x_nchw, params):
    """Pure-JAX reference mirroring the PyTorch forward (training-mode BN).

    x/w1/w2 are quantized to bf16 (then computed in f32) to match the kernel's
    precision choice, so the comparison isolates algorithmic equivalence.
    """
    n = x_nchw.shape[0]
    x = x_nchw.reshape(n, -1)
    w1, b1, g1, be1, w2, b2, g2, be2 = params
    x = x.astype(jnp.bfloat16).astype(jnp.float32)
    w1 = w1.astype(jnp.bfloat16).astype(jnp.float32)
    w2 = w2.astype(jnp.bfloat16).astype(jnp.float32)

    def layer(h, w, b, g, be):
        y = h @ w + b
        m = jnp.mean(y, axis=0, keepdims=True)
        v = jnp.mean((y - m) ** 2, axis=0, keepdims=True)
        y = (y - m) / jnp.sqrt(v + BN_EPS) * g + be
        return jnp.where(y > 0, y, LEAKY_SLOPE * y)

    h = layer(x, w1, b1, g1, be1)
    return layer(h, w2, b2, g2, be2)


def make_params(key, in_channels, representation_size):
    ks = jax.random.split(key, 6)
    # Linear weights stored already transposed: (in, out).
    w1 = jax.random.normal(ks[0], (in_channels, representation_size), jnp.float32) * 0.05
    b1 = jax.random.normal(ks[1], (1, representation_size), jnp.float32) * 0.05
    w2 = jax.random.normal(ks[2], (representation_size, representation_size), jnp.float32) * 0.05
    b2 = jax.random.normal(ks[3], (1, representation_size), jnp.float32) * 0.05
    # BatchNorm affine params (perturb gamma so the affine path is exercised).
    g1 = 1.0 + 0.1 * jax.random.normal(ks[4], (1, representation_size), jnp.float32)
    be1 = jnp.zeros((1, representation_size), jnp.float32)
    g2 = 1.0 + 0.1 * jax.random.normal(ks[5], (1, representation_size), jnp.float32)
    be2 = jnp.zeros((1, representation_size), jnp.float32)
    return (w1, b1, g1, be1, w2, b2, g2, be2)


if __name__ == "__main__":
    key = jax.random.PRNGKey(0)
    k_x, k_p = jax.random.split(key)

    # Small shapes consistent with the module: pooled ROI features,
    # (N, C, H, W) = (8, 4, 4, 4) -> in_channels = 64, representation_size = 32.
    N, C, H, W = 8, 4, 4, 4
    in_channels = C * H * W
    representation_size = 32

    x = jax.random.normal(k_x, (N, C, H, W), jnp.float32)
    params = make_params(k_p, in_channels, representation_size)

    out = jax.block_until_ready(box_head_forward(x, params))
    assert out.shape == (N, representation_size)
    assert bool(jnp.all(jnp.isfinite(out)))

    ref = _reference_forward(x, params)
    # bf16 matmul operands (and a bf16 cast of the fc1 activations) vs the f32
    # reference -> allow ~1e-2 slack.
    assert jnp.allclose(out, ref, atol=2e-2, rtol=2e-2), "mismatch vs JAX reference"

    print("KERNEL_OK")
</pallas_src>

<mosaic_0001>
module attributes {stable_mosaic.version = 11 : i64} {
  func.func @box_head_kernel(%arg0: i32, %arg1: memref<8x128xbf16, #tpu.memory_space<vmem>>, %arg2: memref<128x128xbf16, #tpu.memory_space<vmem>>, %arg3: memref<1x128xf32, #tpu.memory_space<vmem>>, %arg4: memref<1x128xf32, #tpu.memory_space<vmem>>, %arg5: memref<128x128xbf16, #tpu.memory_space<vmem>>, %arg6: memref<1x128xf32, #tpu.memory_space<vmem>>, %arg7: memref<1x128xf32, #tpu.memory_space<vmem>>, %arg8: memref<8x128xf32, #tpu.memory_space<vmem>>, %arg9: memref<8x128xf32, #tpu.memory_space<vmem>>) attributes {dimension_semantics = [#tpu.dimension_semantics<arbitrary>], iteration_bounds = array<i64: 1>, scalar_prefetch = 0 : i64, scratch_operands = 1 : i64, tpu.core_type = #tpu.core_type<tc>, window_params = [{transform_indices = @transform_0, window_bounds = array<i64: 8, 128>}, {transform_indices = @transform_1, window_bounds = array<i64: 128, 128>}, {pipeline_mode = #tpu.pipeline_mode<synchronous>, transform_indices = @transform_2, window_bounds = array<i64: 1, 128>}, {pipeline_mode = #tpu.pipeline_mode<synchronous>, transform_indices = @transform_3, window_bounds = array<i64: 1, 128>}, {pipeline_mode = #tpu.pipeline_mode<synchronous>, transform_indices = @transform_4, window_bounds = array<i64: 128, 128>}, {pipeline_mode = #tpu.pipeline_mode<synchronous>, transform_indices = @transform_5, window_bounds = array<i64: 1, 128>}, {pipeline_mode = #tpu.pipeline_mode<synchronous>, transform_indices = @transform_6, window_bounds = array<i64: 1, 128>}, {pipeline_mode = #tpu.pipeline_mode<synchronous>, transform_indices = @transform_7, window_bounds = array<i64: 8, 128>}]} {
    %c0_i32 = arith.constant 0 : i32
    %0 = arith.cmpi eq, %arg0, %c0_i32 : i32
    %1 = arith.extui %0 : i1 to i32
    %c0_i32_0 = arith.constant 0 : i32
    %2 = arith.cmpi ne, %1, %c0_i32_0 : i32
    scf.if %2 {
      %cst_10 = arith.constant 0.000000e+00 : f32
      %12 = vector.broadcast %cst_10 : f32 to vector<8x128xf32>
      %c0_11 = arith.constant 0 : index
      %c0_12 = arith.constant 0 : index
      %13 = vector.load %arg9[%c0_11, %c0_12] : memref<8x128xf32, #tpu.memory_space<vmem>>, vector<8x128xf32>
      tpu.vector_store %arg9[%c0_11, %c0_12], %12 {strides = array<i32>} : memref<8x128xf32, #tpu.memory_space<vmem>>, vector<8x128xf32>,
    } else {
    }
    %c0 = arith.constant 0 : index
    %c0_1 = arith.constant 0 : index
    %3 = vector.load %arg9[%c0, %c0_1] : memref<8x128xf32, #tpu.memory_space<vmem>>, vector<8x128xf32>
    %c0_2 = arith.constant 0 : index
    %c0_3 = arith.constant 0 : index
    %4 = vector.load %arg1[%c0_2, %c0_3] : memref<8x128xbf16, #tpu.memory_space<vmem>>, vector<8x128xbf16>
    %c0_4 = arith.constant 0 : index
    %c0_5 = arith.constant 0 : index
    %5 = vector.load %arg2[%c0_4, %c0_5] : memref<128x128xbf16, #tpu.memory_space<vmem>>, vector<128x128xbf16>
    %cst = arith.constant dense<0.000000e+00> : vector<8x128xf32>
    %6 = tpu.matmul %4, %5, %cst {dimension_numbers = #tpu.dot_dimension_numbers<[1], [0], [0], [1], [0, 0, 1, 1], [], []>} : vector<8x128xbf16>, vector<128x128xbf16>, vector<8x128xf32> -> vector<8x128xf32>
    %7 = arith.addf %3, %6 : vector<8x128xf32>
    %c0_6 = arith.constant 0 : index
    %c0_7 = arith.constant 0 : index
    %8 = vector.load %arg9[%c0_6, %c0_7] : memref<8x128xf32, #tpu.memory_space<vmem>>, vector<8x128xf32>
    tpu.vector_store %arg9[%c0_6, %c0_7], %7 {strides = array<i32>} : memref<8x128xf32, #tpu.memory_space<vmem>>, vector<8x128xf32>,
    %c0_i32_8 = arith.constant 0 : i32
    %9 = arith.cmpi eq, %arg0, %c0_i32_8 : i32
    %10 = arith.extui %9 : i1 to i32
    %c0_i32_9 = arith.constant 0 : i32
    %11 = arith.cmpi ne, %10, %c0_i32_9 : i32
    scf.if %11 {
      %c0_10 = arith.constant 0 : index
      %c0_11 = arith.constant 0 : index
      %12 = vector.load %arg9[%c0_10, %c0_11] : memref<8x128xf32, #tpu.memory_space<vmem>>, vector<8x128xf32>
      %c0_12 = arith.constant 0 : index
      %c0_13 = arith.constant 0 : index
      %13 = vector.load %arg3[%c0_12, %c0_13] : memref<1x128xf32, #tpu.memory_space<vmem>>, vector<1x128xf32>
      %c0_14 = arith.constant 0 : index
      %c0_15 = arith.constant 0 : index
      %14 = vector.load %arg4[%c0_14, %c0_15] : memref<1x128xf32, #tpu.memory_space<vmem>>, vector<1x128xf32>
      %cst_16 = arith.constant dense<0.000000e+00> : vector<128xf32>
      %15 = vector.multi_reduction <add>, %12, %cst_16 [0] : vector<8x128xf32> to vector<128xf32>
      %16 = vector.shape_cast %15 : vector<128xf32> to vector<1x128xf32>
      %17 = arith.mulf %12, %12 : vector<8x128xf32>
      %cst_17 = arith.constant dense<0.000000e+00> : vector<128xf32>
      %18 = vector.multi_reduction <add>, %17, %cst_17 [0] : vector<8x128xf32> to vector<128xf32>
      %19 = vector.shape_cast %18 : vector<128xf32> to vector<1x128xf32>
      %cst_18 = arith.constant 1.250000e-01 : f32
      %20 = vector.broadcast %cst_18 : f32 to vector<1x128xf32>
      %21 = arith.mulf %16, %20 : vector<1x128xf32>
      %cst_19 = arith.constant 1.250000e-01 : f32
      %22 = vector.broadcast %cst_19 : f32 to vector<1x128xf32>
      %23 = arith.mulf %19, %22 : vector<1x128xf32>
      %24 = arith.mulf %21, %21 : vector<1x128xf32>
      %25 = arith.subf %23, %24 : vector<1x128xf32>
      %cst_20 = arith.constant 0.000000e+00 : f32
      %26 = vector.broadcast %cst_20 : f32 to vector<1x128xf32>
      %27 = arith.maximumf %25, %26 : vector<1x128xf32>
      %cst_21 = arith.constant 9.99999974E-6 : f32
      %28 = vector.broadcast %cst_21 : f32 to vector<1x128xf32>
      %29 = arith.addf %27, %28 : vector<1x128xf32>
      %30 = math.rsqrt %29 : vector<1x128xf32>
      %31 = arith.mulf %13, %30 : vector<1x128xf32>
      %32 = vector.broadcast %21 : vector<1x128xf32> to vector<8x128xf32>
      %33 = arith.subf %12, %32 : vector<8x128xf32>
      %34 = vector.broadcast %31 : vector<1x128xf32> to vector<8x128xf32>
      %35 = arith.mulf %33, %34 : vector<8x128xf32>
      %36 = vector.broadcast %14 : vector<1x128xf32> to vector<8x128xf32>
      %37 = arith.addf %35, %36 : vector<8x128xf32>
      %cst_22 = arith.constant 0.00999999977 : f32
      %38 = vector.broadcast %cst_22 : f32 to vector<8x128xf32>
      %39 = arith.mulf %38, %37 : vector<8x128xf32>
      %40 = arith.maximumf %37, %39 : vector<8x128xf32>
      %41 = arith.truncf %40 : vector<8x128xf32> to vector<8x128xbf16>
      %c0_23 = arith.constant 0 : index
      %c0_24 = arith.constant 0 : index
      %42 = vector.load %arg5[%c0_23, %c0_24] : memref<128x128xbf16, #tpu.memory_space<vmem>>, vector<128x128xbf16>
      %cst_25 = arith.constant dense<0.000000e+00> : vector<8x128xf32>
      %43 = tpu.matmul %41, %42, %cst_25 {dimension_numbers = #tpu.dot_dimension_numbers<[1], [0], [0], [1], [0, 0, 1, 1], [], []>} : vector<8x128xbf16>, vector<128x128xbf16>, vector<8x128xf32> -> vector<8x128xf32>
      %c0_26 = arith.constant 0 : index
      %c0_27 = arith.constant 0 : index
      %44 = vector.load %arg6[%c0_26, %c0_27] : memref<1x128xf32, #tpu.memory_space<vmem>>, vector<1x128xf32>
      %c0_28 = arith.constant 0 : index
      %c0_29 = arith.constant 0 : index
      %45 = vector.load %arg7[%c0_28, %c0_29] : memref<1x128xf32, #tpu.memory_space<vmem>>, vector<1x128xf32>
      %cst_30 = arith.constant dense<0.000000e+00> : vector<128xf32>
      %46 = vector.multi_reduction <add>, %43, %cst_30 [0] : vector<8x128xf32> to vector<128xf32>
      %47 = vector.shape_cast %46 : vector<128xf32> to vector<1x128xf32>
      %48 = arith.mulf %43, %43 : vector<8x128xf32>
      %cst_31 = arith.constant dense<0.000000e+00> : vector<128xf32>
      %49 = vector.multi_reduction <add>, %48, %cst_31 [0] : vector<8x128xf32> to vector<128xf32>
      %50 = vector.shape_cast %49 : vector<128xf32> to vector<1x128xf32>
      %cst_32 = arith.constant 1.250000e-01 : f32
      %51 = vector.broadcast %cst_32 : f32 to vector<1x128xf32>
      %52 = arith.mulf %47, %51 : vector<1x128xf32>
      %cst_33 = arith.constant 1.250000e-01 : f32
      %53 = vector.broadcast %cst_33 : f32 to vector<1x128xf32>
      %54 = arith.mulf %50, %53 : vector<1x128xf32>
      %55 = arith.mulf %52, %52 : vector<1x128xf32>
      %56 = arith.subf %54, %55 : vector<1x128xf32>
      %cst_34 = arith.constant 0.000000e+00 : f32
      %57 = vector.broadcast %cst_34 : f32 to vector<1x128xf32>
      %58 = arith.maximumf %56, %57 : vector<1x128xf32>
      %cst_35 = arith.constant 9.99999974E-6 : f32
      %59 = vector.broadcast %cst_35 : f32 to vector<1x128xf32>
      %60 = arith.addf %58, %59 : vector<1x128xf32>
      %61 = math.rsqrt %60 : vector<1x128xf32>
      %62 = arith.mulf %44, %61 : vector<1x128xf32>
      %63 = vector.broadcast %52 : vector<1x128xf32> to vector<8x128xf32>
      %64 = arith.subf %43, %63 : vector<8x128xf32>
      %65 = vector.broadcast %62 : vector<1x128xf32> to vector<8x128xf32>
      %66 = arith.mulf %64, %65 : vector<8x128xf32>
      %67 = vector.broadcast %45 : vector<1x128xf32> to vector<8x128xf32>
      %68 = arith.addf %66, %67 : vector<8x128xf32>
      %cst_36 = arith.constant 0.00999999977 : f32
      %69 = vector.broadcast %cst_36 : f32 to vector<8x128xf32>
      %70 = arith.mulf %69, %68 : vector<8x128xf32>
      %71 = arith.maximumf %68, %70 : vector<8x128xf32>
      %c0_37 = arith.constant 0 : index
      %c0_38 = arith.constant 0 : index
      %72 = vector.load %arg8[%c0_37, %c0_38] : memref<8x128xf32, #tpu.memory_space<vmem>>, vector<8x128xf32>
      tpu.vector_store %arg8[%c0_37, %c0_38], %71 {strides = array<i32>} : memref<8x128xf32, #tpu.memory_space<vmem>>, vector<8x128xf32>,
    } else {
    }
    return
  }
  func.func @transform_0(%arg0: i32) -> (i32, i32) {
    %c0_i32 = arith.constant 0 : i32
    %c0_i32_0 = arith.constant 0 : i32
    return %c0_i32, %arg0 : i32, i32
  }
  func.func @transform_1(%arg0: i32) -> (i32, i32) {
    %c0_i32 = arith.constant 0 : i32
    %c0_i32_0 = arith.constant 0 : i32
    return %arg0, %c0_i32 : i32, i32
  }
  func.func @transform_2(%arg0: i32) -> (i32, i32) {
    %c0_i32 = arith.constant 0 : i32
    %c0_i32_0 = arith.constant 0 : i32
    %c0_i32_1 = arith.constant 0 : i32
    return %c0_i32, %c0_i32_0 : i32, i32
  }
  func.func @transform_3(%arg0: i32) -> (i32, i32) {
    %c0_i32 = arith.constant 0 : i32
    %c0_i32_0 = arith.constant 0 : i32
    %c0_i32_1 = arith.constant 0 : i32
    return %c0_i32, %c0_i32_0 : i32, i32
  }
  func.func @transform_4(%arg0: i32) -> (i32, i32) {
    %c0_i32 = arith.constant 0 : i32
    %c0_i32_0 = arith.constant 0 : i32
    %c0_i32_1 = arith.constant 0 : i32
    return %c0_i32, %c0_i32_0 : i32, i32
  }
  func.func @transform_5(%arg0: i32) -> (i32, i32) {
    %c0_i32 = arith.constant 0 : i32
    %c0_i32_0 = arith.constant 0 : i32
    %c0_i32_1 = arith.constant 0 : i32
    return %c0_i32, %c0_i32_0 : i32, i32
  }
  func.func @transform_6(%arg0: i32) -> (i32, i32) {
    %c0_i32 = arith.constant 0 : i32
    %c0_i32_0 = arith.constant 0 : i32
    %c0_i32_1 = arith.constant 0 : i32
    return %c0_i32, %c0_i32_0 : i32, i32
  }
  func.func @transform_7(%arg0: i32) -> (i32, i32) {
    %c0_i32 = arith.constant 0 : i32
    %c0_i32_0 = arith.constant 0 : i32
    %c0_i32_1 = arith.constant 0 : i32
    return %c0_i32, %c0_i32_0 : i32, i32
  }
}

</mosaic_0001>

<llo_original>
// kernel: tpu_custom_call.1
$region0: #{tpu_custom_call.1}
  #allocation0 [shape = 'u32[]', space=smem, size = 0x4, offset = 0x4, fixed_abs, tag = 'smem constant byte address 0x4 - core index']
  #allocation1 [shape = 'u32[72,128]{1,0:T(1,128)}', space=vmem, size = 0x9000, scoped, tag = 'internal scratch']
  #allocation2 [shape = 'f32[8,128]{1,0:T(8,128)}', space=vmem, size = 0x1000, scoped, tag = 'scratch operand']
  %s0 = inlined_call_operand.hbm [shape: bf16[8,128], index: 0, kind: input, shape index: {}]
  %s1 = inlined_call_operand.hbm [shape: bf16[128,128], index: 1, kind: input, shape index: {}]
  %s2 = inlined_call_operand.vmem [shape: f32[1,128], index: 2, kind: input, shape index: {}]
  %s3 = inlined_call_operand.vmem [shape: f32[1,128], index: 3, kind: input, shape index: {}]
  %s4 = inlined_call_operand.hbm [shape: bf16[128,128], index: 4, kind: input, shape index: {}]
  %s5 = inlined_call_operand.vmem [shape: f32[1,128], index: 5, kind: input, shape index: {}]
  %s6 = inlined_call_operand.vmem [shape: f32[1,128], index: 6, kind: input, shape index: {}]
  %s7 = inlined_call_operand.hbm [shape: f32[8,128], index: 7, kind: output, shape index: {}]
  %s8 = sld [smem:[#allocation0]]
  $region58: #{tpu_custom_call.1} parent=0
    _
  %s10 = ssub.s32 1, %s8
  %s11 = scalar_select 0, %s10, %s8
  $region1: #{tpu_custom_call.1} parent=0
    #allocation3 [shape = 'u8[2048]{0}', space=vmem, size = 0x800, scoped, tag = 'input window, operand 0, single buffered']
    #allocation4 [shape = 's32[1]{0}', space=sflag, size = 0x4, scoped, tag = 'scoped memory for tpu_custom_call.1']
    #allocation5 [shape = 's32[1]{0}', space=sflag, size = 0x4, scoped, tag = 'scoped memory for tpu_custom_call.1']
    #allocation6 [shape = 'u8[32768]{0}', space=vmem, size = 0x8000, scoped, tag = 'input window, operand 1, single buffered']
    #allocation7 [shape = 's32[1]{0}', space=sflag, size = 0x4, scoped, tag = 'scoped memory for tpu_custom_call.1']
    #allocation8 [shape = 'u8[32768]{0}', space=vmem, size = 0x8000, scoped, tag = 'input window, operand 4, single buffered']
    #allocation9 [shape = 'u8[4096]{0}', space=vmem, size = 0x1000, scoped, tag = 'output window, operand 0, single buffered']
    %12 = vsyncpa [#allocation4], 0
    %13 = vsyncpa [#allocation7], 0
    %14 = vsyncpa [#allocation5], 0
    // Predicated region
    $region2: #{tpu_custom_call.1} parent=1 // pred_check
      _
    $region3: #{tpu_custom_call.1} parent=1 // pred_check_branch
      %16 = sbr.rel (0) target = $region5
    $region4: #{tpu_custom_call.1} parent=1 // pred_region
      %18 = vsyncadd [#allocation4], 0
      %s20 = sshll.u32 %s0, 4
      %s21 = int_to_ptr.hbm [resolvable:$true] %s20
      %s22 = sshll.u32 [#allocation3], 4
      %s23 = int_to_ptr.vmem [resolvable:$true] %s22
      %25 = dma.hbm_to_vmem [thread:$0]  %s21, 64, %s23, [#allocation4]
    $region5: #{tpu_custom_call.1} parent=1 // pred_fallthru
      _
    // Predicated region
    $region6: #{tpu_custom_call.1} parent=1 // pred_check
      _
    $region7: #{tpu_custom_call.1} parent=1 // pred_check_branch
      %27 = sbr.rel (0) target = $region9
    $region8: #{tpu_custom_call.1} parent=1 // pred_region
      %29 = vsyncadd [#allocation7], 0
      %s30 = sshll.u32 %s1, 4
      %s31 = int_to_ptr.hbm [resolvable:$true] %s30
      %s32 = sshll.u32 [#allocation6], 4
      %s33 = int_to_ptr.vmem [resolvable:$true] %s32
      %38 = dma.hbm_to_vmem [thread:$0]  %s31, 1024, %s33, [#allocation7], 64, 64, 4
    $region9: #{tpu_custom_call.1} parent=1 // pred_fallthru
      _
    // Predicated region
    $region10: #{tpu_custom_call.1} parent=1 // pred_check
      _
    $region11: #{tpu_custom_call.1} parent=1 // pred_check_branch
      %40 = sbr.rel (0) target = $region13
    $region12: #{tpu_custom_call.1} parent=1 // pred_region
      _
    $region13: #{tpu_custom_call.1} parent=1 // pred_fallthru
      _
    // Predicated region
    $region14: #{tpu_custom_call.1} parent=1 // pred_check
      _
    $region15: #{tpu_custom_call.1} parent=1 // pred_check_branch
      %42 = sbr.rel (0) target = $region17
    $region16: #{tpu_custom_call.1} parent=1 // pred_region
      _
    $region17: #{tpu_custom_call.1} parent=1 // pred_fallthru
      _
    // Predicated region
    $region18: #{tpu_custom_call.1} parent=1 // pred_check
      _
    $region19: #{tpu_custom_call.1} parent=1 // pred_check_branch
      %44 = sbr.rel (0) target = $region21
    $region20: #{tpu_custom_call.1} parent=1 // pred_region
      %46 = vsyncadd [#allocation7], 0
      %s47 = sshll.u32 %s4, 4
      %s48 = int_to_ptr.hbm [resolvable:$true] %s47
      %s49 = sshll.u32 [#allocation8], 4
      %s50 = int_to_ptr.vmem [resolvable:$true] %s49
      %55 = dma.hbm_to_vmem [thread:$0]  %s48, 1024, %s50, [#allocation7], 64, 64, 4
    $region21: #{tpu_custom_call.1} parent=1 // pred_fallthru
      _
    // Predicated region
    $region22: #{tpu_custom_call.1} parent=1 // pred_check
      _
    $region23: #{tpu_custom_call.1} parent=1 // pred_check_branch
      %57 = sbr.rel (0) target = $region25
    $region24: #{tpu_custom_call.1} parent=1 // pred_region
      _
    $region25: #{tpu_custom_call.1} parent=1 // pred_fallthru
      _
    // Predicated region
    $region26: #{tpu_custom_call.1} parent=1 // pred_check
      _
    $region27: #{tpu_custom_call.1} parent=1 // pred_check_branch
      %59 = sbr.rel (0) target = $region29
    $region28: #{tpu_custom_call.1} parent=1 // pred_region
      _
    $region29: #{tpu_custom_call.1} parent=1 // pred_fallthru
      _
    // Predicated region
    $region30: #{tpu_custom_call.1} parent=1 // pred_check
      _
    $region31: #{tpu_custom_call.1} parent=1 // pred_check_branch
      %61 = sbr.rel (0) target = $region33
    $region32: #{tpu_custom_call.1} parent=1 // pred_region
      %63 = dma.done [#allocation4], 64
    $region33: #{tpu_custom_call.1} parent=1 // pred_fallthru
      _
    // Predicated region
    $region34: #{tpu_custom_call.1} parent=1 // pred_check
      _
    $region35: #{tpu_custom_call.1} parent=1 // pred_check_branch
      %65 = sbr.rel (0) target = $region37
    $region36: #{tpu_custom_call.1} parent=1 // pred_region
      %67 = dma.done [#allocation7], 1024
    $region37: #{tpu_custom_call.1} parent=1 // pred_fallthru
      _
    // Predicated region
    $region38: #{tpu_custom_call.1} parent=1 // pred_check
      _
    $region39: #{tpu_custom_call.1} parent=1 // pred_check_branch
      %69 = sbr.rel (0) target = $region41
    $region40: #{tpu_custom_call.1} parent=1 // pred_region
      %71 = dma.done [#allocation7], 1024
    $region41: #{tpu_custom_call.1} parent=1 // pred_fallthru
      _
    %p72 = scmp.eq.s32.totalorder 0, 0
    // Predicated region
    $region42: #{tpu_custom_call.1} parent=1 // pred_check
      %p73 = pneg %p72
    $region43: #{tpu_custom_call.1} parent=1 // pred_check_branch
      %75 = sbr.rel (%p73) target = $region45
    $region44: #{tpu_custom_call.1} parent=1 // pred_region
      %76 = vst [vmem:[#allocation2] sm:$0xff] 0.0
    $region45: #{tpu_custom_call.1} parent=1 // pred_fallthru
      _
    %v77 = vld [vmem:[#allocation2] sm:$0xff]
    %v78 = vld [vmem:[#allocation3] sm:$0xf]
    %v79 = vld [vmem:[#allocation6] sm:$0xf]
    %v80 = vld [vmem:[#allocation6 + $0x4] sm:$0xf]
    %v81 = vld [vmem:[#allocation6 + $0x8] sm:$0xf]
    %v82 = vld [vmem:[#allocation6 + $0xc] sm:$0xf]
    %v83 = vld [vmem:[#allocation6 + $0x10] sm:$0xf]
    %v84 = vld [vmem:[#allocation6 + $0x14] sm:$0xf]
    %v85 = vld [vmem:[#allocation6 + $0x18] sm:$0xf]
    %v86 = vld [vmem:[#allocation6 + $0x1c] sm:$0xf]
    %v87 = vld [vmem:[#allocation6 + $0x20] sm:$0xf]
    %v88 = vld [vmem:[#allocation6 + $0x24] sm:$0xf]
    %v89 = vld [vmem:[#allocation6 + $0x28] sm:$0xf]
    %v90 = vld [vmem:[#allocation6 + $0x2c] sm:$0xf]
    %v91 = vld [vmem:[#allocation6 + $0x30] sm:$0xf]
    %v92 = vld [vmem:[#allocation6 + $0x34] sm:$0xf]
    %v93 = vld [vmem:[#allocation6 + $0x38] sm:$0xf]
    %v94 = vld [vmem:[#allocation6 + $0x3c] sm:$0xf]
    %v111 = vunpack.c.l.b16 %v79
    %v112 = vunpack.c.l.b16 %v80
    %v113 = vunpack.c.l.b16 %v81
    %v114 = vunpack.c.l.b16 %v82
    %v115 = vunpack.c.l.b16 %v83
    %v116 = vunpack.c.l.b16 %v84
    %v117 = vunpack.c.l.b16 %v85
    %v118 = vunpack.c.l.b16 %v86
    %v119 = vunpack.c.l.b16 %v87
    %v120 = vunpack.c.l.b16 %v88
    %v121 = vunpack.c.l.b16 %v89
    %v122 = vunpack.c.l.b16 %v90
    %v123 = vunpack.c.l.b16 %v91
    %v124 = vunpack.c.l.b16 %v92
    %v125 = vunpack.c.l.b16 %v93
    %v126 = vunpack.c.l.b16 %v94
    %v127 = vpack.c.b16 %v112, %v111
    %v128 = vpack.c.b16 %v114, %v113
    %v129 = vpack.c.b16 %v116, %v115
    %v130 = vpack.c.b16 %v118, %v117
    %v131 = vpack.c.b16 %v120, %v119
    %v132 = vpack.c.b16 %v122, %v121
    %v133 = vpack.c.b16 %v124, %v123
    %v134 = vpack.c.b16 %v126, %v125
    %143 = vmatpush.bf16.msra.mxu0 %v134
    %144 = vmatpush.bf16.msra.mxu0 %v133
    %145 = vmatpush.bf16.msra.mxu0 %v132
    %146 = vmatpush.bf16.msra.mxu0 %v131
    %147 = vmatpush.bf16.msra.mxu0 %v130
    %148 = vmatpush.bf16.msra.mxu0 %v129
    %149 = vmatpush.bf16.msra.mxu0 %v128
    %150 = vmatpush.bf16.msra.mxu0 %v127
    %151 = vmatmul.bf16.gmra.mxu0 %v78
    %v152 = vpop.f32.mrf.mxu0
    %v153 = vadd.f32 0.0, %v152
    %v154 = vpop.f32.mrf.mxu0
    %155 = vdwg.mxu0
    %v156 = vadd.f32 %v77, %v153
    %157 = vst [vmem:[#allocation2] sm:$0xff] %v156
    // Predicated region
    $region46: #{tpu_custom_call.1} parent=1 // pred_check
      %p158 = pneg %p72
    $region47: #{tpu_custom_call.1} parent=1 // pred_check_branch
      %160 = sbr.rel (%p158) target = $region49
    $region48: #{tpu_custom_call.1} parent=1 // pred_region
      %v161 = vld [vmem:[#allocation2] sm:$0xff]
      %v162 = vld [vmem:[%s2] sm:$0x1]
      %v163 = vld [vmem:[%s3] sm:$0x1]
      %v164 = vrot.slane %v161, 4
      %v165 = vadd.f32 %v161, %v164
      %v166 = vrot.slane %v165, 2
      %v167 = vadd.f32 %v165, %v166
      %v168 = vrot.slane %v167, 1
      %v169 = vadd.f32 %v167, %v168
      %v170 = vmul.f32 %v161, %v161
      %v171 = vrot.slane %v170, 4
      %v172 = vadd.f32 %v170, %v171
      %v173 = vrot.slane %v172, 2
      %v174 = vadd.f32 %v172, %v173
      %v175 = vrot.slane %v174, 1
      %v176 = vadd.f32 %v174, %v175
      %v177 = vmul.f32 %v169, 0.125
      %v178 = vmul.f32 %v176, 0.125
      %v179 = vmul.f32 %v177, %v177
      %v180 = vsub.f32 %v178, %v179
      %v181 = vmax.f32 %v180, 0.0
      %v182 = vadd.f32 %v181, 1e-05
      %v183 = vrsqrt.pop %v182
      %v184 = vmul.f32 %v183, %v182
      %v185 = vmul.f32 %v184, %v183
      %v186 = vmul.f32 0.5, %v185
      %v187 = vsub.f32 1.5, %v186
      %v188 = vmul.f32 %v183, %v187
      %vm189 = vweird.f32 %v182
      %vm190 = vweird.f32 %v183
      %vm191 = vmor %vm189, %vm190
      %v192 = vsel %vm191, %v183, %v188
      %v193 = vmul.f32 %v162, %v192
      %v194 = vsub.f32 %v161, %v177
      %v196 = vperm.slane %v193, 0
      %v198 = vmul.f32 %v194, %v196
      %v200 = vperm.slane %v163, 0
      %v202 = vadd.f32 %v198, %v200
      %v203 = vmul.f32 %v202, 0.01
      %v204 = vmax.f32 %v202, %v203
      %v205 = vpack.c.bf16 %v204, %v204
      %v206 = vld [vmem:[#allocation8] sm:$0xf]
      %v207 = vld [vmem:[#allocation8 + $0x4] sm:$0xf]
      %v208 = vld [vmem:[#allocation8 + $0x8] sm:$0xf]
      %v209 = vld [vmem:[#allocation8 + $0xc] sm:$0xf]
      %v210 = vld [vmem:[#allocation8 + $0x10] sm:$0xf]
      %v211 = vld [vmem:[#allocation8 + $0x14] sm:$0xf]
      %v212 = vld [vmem:[#allocation8 + $0x18] sm:$0xf]
      %v213 = vld [vmem:[#allocation8 + $0x1c] sm:$0xf]
      %v214 = vld [vmem:[#allocation8 + $0x20] sm:$0xf]
      %v215 = vld [vmem:[#allocation8 + $0x24] sm:$0xf]
      %v216 = vld [vmem:[#allocation8 + $0x28] sm:$0xf]
      %v217 = vld [vmem:[#allocation8 + $0x2c] sm:$0xf]
      %v218 = vld [vmem:[#allocation8 + $0x30] sm:$0xf]
      %v219 = vld [vmem:[#allocation8 + $0x34] sm:$0xf]
      %v220 = vld [vmem:[#allocation8 + $0x38] sm:$0xf]
      %v221 = vld [vmem:[#allocation8 + $0x3c] sm:$0xf]
      %v238 = vunpack.c.l.b16 %v206
      %v239 = vunpack.c.l.b16 %v207
      %v240 = vunpack.c.l.b16 %v208
      %v241 = vunpack.c.l.b16 %v209
      %v242 = vunpack.c.l.b16 %v210
      %v243 = vunpack.c.l.b16 %v211
      %v244 = vunpack.c.l.b16 %v212
      %v245 = vunpack.c.l.b16 %v213
      %v246 = vunpack.c.l.b16 %v214
      %v247 = vunpack.c.l.b16 %v215
      %v248 = vunpack.c.l.b16 %v216
      %v249 = vunpack.c.l.b16 %v217
      %v250 = vunpack.c.l.b16 %v218
      %v251 = vunpack.c.l.b16 %v219
      %v252 = vunpack.c.l.b16 %v220
      %v253 = vunpack.c.l.b16 %v221
      %v254 = vpack.c.b16 %v239, %v238
      %v255 = vpack.c.b16 %v241, %v240
      %v256 = vpack.c.b16 %v243, %v242
      %v257 = vpack.c.b16 %v245, %v244
      %v258 = vpack.c.b16 %v247, %v246
      %v259 = vpack.c.b16 %v249, %v248
      %v260 = vpack.c.b16 %v251, %v250
      %v261 = vpack.c.b16 %v253, %v252
      %270 = vmatpush.bf16.msra.mxu0 %v261
      %271 = vmatpush.bf16.msra.mxu0 %v260
      %272 = vmatpush.bf16.msra.mxu0 %v259
      %273 = vmatpush.bf16.msra.mxu0 %v258
      %274 = vmatpush.bf16.msra.mxu0 %v257
      %275 = vmatpush.bf16.msra.mxu0 %v256
      %276 = vmatpush.bf16.msra.mxu0 %v255
      %277 = vmatpush.bf16.msra.mxu0 %v254
      %278 = vmatmul.bf16.gmra.mxu0 %v205
      %v279 = vpop.f32.mrf.mxu0
      %v280 = vadd.f32 0.0, %v279
      %v281 = vpop.f32.mrf.mxu0
      %282 = vdwg.mxu0
      %v283 = vld [vmem:[%s5] sm:$0x1]
      %v284 = vld [vmem:[%s6] sm:$0x1]
      %v285 = vrot.slane %v280, 4
      %v286 = vadd.f32 %v280, %v285
      %v287 = vrot.slane %v286, 2
      %v288 = vadd.f32 %v286, %v287
      %v289 = vrot.slane %v288, 1
      %v290 = vadd.f32 %v288, %v289
      %v291 = vmul.f32 %v280, %v280
      %v292 = vrot.slane %v291, 4
      %v293 = vadd.f32 %v291, %v292
      %v294 = vrot.slane %v293, 2
      %v295 = vadd.f32 %v293, %v294
      %v296 = vrot.slane %v295, 1
      %v297 = vadd.f32 %v295, %v296
      %v298 = vmul.f32 %v290, 0.125
      %v299 = vmul.f32 %v297, 0.125
      %v300 = vmul.f32 %v298, %v298
      %v301 = vsub.f32 %v299, %v300
      %v302 = vmax.f32 %v301, 0.0
      %v303 = vadd.f32 %v302, 1e-05
      %v304 = vrsqrt.pop %v303
      %v305 = vmul.f32 %v304, %v303
      %v306 = vmul.f32 %v305, %v304
      %v307 = vmul.f32 0.5, %v306
      %v308 = vsub.f32 1.5, %v307
      %v309 = vmul.f32 %v304, %v308
      %vm310 = vweird.f32 %v303
      %vm311 = vweird.f32 %v304
      %vm312 = vmor %vm310, %vm311
      %v313 = vsel %vm312, %v304, %v309
      %v314 = vmul.f32 %v283, %v313
      %v315 = vsub.f32 %v280, %v298
      %v317 = vperm.slane %v314, 0
      %v319 = vmul.f32 %v315, %v317
      %v321 = vperm.slane %v284, 0
      %v323 = vadd.f32 %v319, %v321
      %v324 = vmul.f32 %v323, 0.01
      %v325 = vmax.f32 %v323, %v324
      %326 = vst [vmem:[#allocation9] sm:$0xff] %v325
    $region49: #{tpu_custom_call.1} parent=1 // pred_fallthru
      _
    // Predicated region
    $region50: #{tpu_custom_call.1} parent=1 // pred_check
      _
    $region51: #{tpu_custom_call.1} parent=1 // pred_check_branch
      %328 = sbr.rel (0) target = $region53
    $region52: #{tpu_custom_call.1} parent=1 // pred_region
      %330 = vsyncadd [#allocation5], 0
      %s332 = sshll.u32 [#allocation9], 4
      %s333 = int_to_ptr.vmem [resolvable:$true] %s332
      %s334 = sshll.u32 %s7, 4
      %s335 = int_to_ptr.hbm [resolvable:$true] %s334
      %337 = dma.vmem_to_hbm [thread:$0]  %s333, 128, %s335, [#allocation5]
    $region53: #{tpu_custom_call.1} parent=1 // pred_fallthru
      _
    // Predicated region
    $region54: #{tpu_custom_call.1} parent=1 // pred_check
      _
    $region55: #{tpu_custom_call.1} parent=1 // pred_check_branch
      %339 = sbr.rel (0) target = $region57
    $region56: #{tpu_custom_call.1} parent=1 // pred_region
      %341 = dma.done [#allocation5], 128
    $region57: #{tpu_custom_call.1} parent=1 // pred_fallthru
      _
    %342 = vsyncpa [#allocation4], 1
    %343 = vsyncpa [#allocation7], 1
    %344 = vsyncpa [#allocation5], 1

</llo_original>
